<compile_context>
chip_gen: v7x
topology: tpu7x:2x2x1
jax: 0.10.0
libtpu: 0.0.40
codegen_flags: <defaults>
</compile_context>

<pallas_src>
import jax
import jax.numpy as jnp
from jax.experimental import pallas as pl
from jax.experimental.pallas import tpu as pltpu


def _round_up(a, m):
    return -(-a // m) * m


def _logreg_kernel(x_ref, w_ref, b_ref, o_ref):
    # x_ref: (TM, D) VMEM, w_ref: (D, 1) VMEM, b_ref: (1, 1) SMEM, o_ref: (TM, 1) VMEM.
    logits = jnp.dot(x_ref[...], w_ref[...], preferred_element_type=jnp.float32)
    logits = logits + b_ref[0, 0]
    o_ref[...] = jax.nn.sigmoid(logits).astype(o_ref.dtype)


def _choose_tile_rows(B, D, itemsize, x_budget_bytes):
    """Batch-tile rows: VMEM-budget derived; >= 2 grid steps once B is large."""
    # Rows whose double-buffered (TM, D) x tile fits the budget.
    cap = max(8, x_budget_bytes // (2 * D * itemsize))
    cap = (cap // 128) * 128 if cap >= 128 else max(8, (cap // 8) * 8)
    if B <= 256:
        return B  # single full-extent tile; problem is tiny anyway
    # >= 2 grid steps so both v7x TensorCores get work; multiple of 128 keeps
    # the (TM, D) / (TM, 1) blocks aligned to the (8, 128) tiling constraint
    # even when the tail block is partial.
    return min(cap, _round_up(pl.cdiv(B, 2), 128))


def logistic_regression(x, weight, bias, *, x_vmem_budget_bytes=24 << 20):
    """x: (B, D), weight: (1, D), bias: (1,) -> (B, 1) = sigmoid(x @ W.T + b)."""
    B, D = x.shape
    itemsize = x.dtype.itemsize

    TM = _choose_tile_rows(B, D, itemsize, x_vmem_budget_bytes)
    grid = (pl.cdiv(B, TM),)

    w_t = weight.reshape(1, D).T                       # (D, 1): canonical MXU RHS
    bias2d = bias.reshape(1, 1).astype(jnp.float32)    # scalar via SMEM

    # Scoped-VMEM limit from the actual double-buffered footprint, capped for v7x.
    x_buf = 2 * TM * D * itemsize
    w_buf = 2 * _round_up(D, 8) * 128 * itemsize       # (D, 1) lane-padded in VMEM
    o_buf = 2 * _round_up(TM, 8) * 128 * itemsize
    vmem_limit = int(min(48 << 20, max(16 << 20, x_buf + w_buf + o_buf + (2 << 20))))

    return pl.pallas_call(
        _logreg_kernel,
        out_shape=jax.ShapeDtypeStruct((B, 1), x.dtype),
        grid=grid,
        in_specs=[
            pl.BlockSpec((TM, D), lambda i: (i, 0)),            # batch-tiled x
            pl.BlockSpec((D, 1), lambda i: (0, 0)),             # resident weight
            pl.BlockSpec(memory_space=pltpu.MemorySpace.SMEM),  # bias scalar
        ],
        out_specs=pl.BlockSpec((TM, 1), lambda i: (i, 0)),
        compiler_params=pltpu.CompilerParams(
            dimension_semantics=("parallel",),
            vmem_limit_bytes=vmem_limit,
        ),
    )(x, w_t, bias2d)


if __name__ == "__main__":
    key = jax.random.PRNGKey(0)
    kx, kw, kb = jax.random.split(key, 3)

    # Small shapes consistent with the module: nn.Linear(input_size, 1).
    batch, input_size = 8, 32
    bound = 1.0 / (input_size ** 0.5)
    weight = jax.random.uniform(kw, (1, input_size), jnp.float32, -bound, bound)
    bias = jax.random.uniform(kb, (1,), jnp.float32, -bound, bound)
    x = jax.random.normal(kx, (batch, input_size), jnp.float32)

    out = jax.block_until_ready(logistic_regression(x, weight, bias))
    ref = jax.nn.sigmoid(x @ weight.T + bias)
    assert out.shape == (batch, 1)
    assert jnp.allclose(out, ref, atol=2e-3, rtol=2e-3)

    # Second check: multi-tile grid + unpadded (masked) tail block path.
    b2, d2 = 1030, 256
    k2x, k2w, k2b = jax.random.split(jax.random.PRNGKey(1), 3)
    bound2 = 1.0 / (d2 ** 0.5)
    w2 = jax.random.uniform(k2w, (1, d2), jnp.float32, -bound2, bound2)
    bb2 = jax.random.uniform(k2b, (1,), jnp.float32, -bound2, bound2)
    x2 = jax.random.normal(k2x, (b2, d2), jnp.float32)
    out2 = jax.block_until_ready(logistic_regression(x2, w2, bb2))
    ref2 = jax.nn.sigmoid(x2 @ w2.T + bb2)
    assert out2.shape == (b2, 1)
    assert jnp.allclose(out2, ref2, atol=2e-3, rtol=2e-3)

    print("KERNEL_OK")
</pallas_src>

<mosaic_0001>
module attributes {stable_mosaic.version = 11 : i64} {
  func.func @_logreg_kernel(%arg0: i32, %arg1: memref<8x32xf32, #tpu.memory_space<vmem>>, %arg2: memref<32x1xf32, #tpu.memory_space<vmem>>, %arg3: memref<1x1xf32, #tpu.memory_space<smem>>, %arg4: memref<8x1xf32, #tpu.memory_space<vmem>>) attributes {dimension_semantics = [#tpu.dimension_semantics<parallel>], iteration_bounds = array<i64: 1>, scalar_prefetch = 0 : i64, scratch_operands = 0 : i64, tpu.core_type = #tpu.core_type<tc>, window_params = [{transform_indices = @transform_0, window_bounds = array<i64: 8, 32>}, {pipeline_mode = #tpu.pipeline_mode<synchronous>, transform_indices = @transform_1, window_bounds = array<i64: 32, 1>}, {transform_indices = @transform_2, window_bounds = array<i64: 1, 1>}, {transform_indices = @transform_3, window_bounds = array<i64: 8, 1>}]} {
    %c0 = arith.constant 0 : index
    %c0_0 = arith.constant 0 : index
    %0 = vector.load %arg1[%c0, %c0_0] : memref<8x32xf32, #tpu.memory_space<vmem>>, vector<8x32xf32>
    %c0_1 = arith.constant 0 : index
    %c0_2 = arith.constant 0 : index
    %1 = vector.load %arg2[%c0_1, %c0_2] : memref<32x1xf32, #tpu.memory_space<vmem>>, vector<32x1xf32>
    %cst = arith.constant dense<0.000000e+00> : vector<8x1xf32>
    %2 = tpu.matmul %0, %1, %cst {dimension_numbers = #tpu.dot_dimension_numbers<[1], [0], [0], [1], [0, 0, 1, 1], [], []>} : vector<8x32xf32>, vector<32x1xf32>, vector<8x1xf32> -> vector<8x1xf32>
    %c0_3 = arith.constant 0 : index
    %c0_4 = arith.constant 0 : index
    %3 = memref.load %arg3[%c0_3, %c0_4] : memref<1x1xf32, #tpu.memory_space<smem>>
    %4 = vector.broadcast %3 : f32 to vector<8x1xf32>
    %5 = arith.addf %2, %4 : vector<8x1xf32>
    %6 = arith.negf %5 : vector<8x1xf32>
    %7 = math.exp %6 : vector<8x1xf32>
    %cst_5 = arith.constant 1.000000e+00 : f32
    %8 = vector.broadcast %cst_5 : f32 to vector<8x1xf32>
    %9 = arith.addf %8, %7 : vector<8x1xf32>
    %10 = arith.divf %8, %9 : vector<8x1xf32>
    %c0_6 = arith.constant 0 : index
    %c0_7 = arith.constant 0 : index
    %11 = vector.load %arg4[%c0_6, %c0_7] : memref<8x1xf32, #tpu.memory_space<vmem>>, vector<8x1xf32>
    tpu.vector_store %arg4[%c0_6, %c0_7], %10 {strides = array<i32>} : memref<8x1xf32, #tpu.memory_space<vmem>>, vector<8x1xf32>,
    return
  }
  func.func @transform_0(%arg0: i32) -> (i32, i32) {
    %c0_i32 = arith.constant 0 : i32
    %c0_i32_0 = arith.constant 0 : i32
    return %arg0, %c0_i32 : i32, i32
  }
  func.func @transform_1(%arg0: i32) -> (i32, i32) {
    %c0_i32 = arith.constant 0 : i32
    %c0_i32_0 = arith.constant 0 : i32
    %c0_i32_1 = arith.constant 0 : i32
    return %c0_i32, %c0_i32_0 : i32, i32
  }
  func.func @transform_2(%arg0: i32) -> (i32, i32) {
    %c0_i32 = arith.constant 0 : i32
    %c0_i32_0 = arith.constant 0 : i32
    %c0_i32_1 = arith.constant 0 : i32
    return %c0_i32, %c0_i32_0 : i32, i32
  }
  func.func @transform_3(%arg0: i32) -> (i32, i32) {
    %c0_i32 = arith.constant 0 : i32
    %c0_i32_0 = arith.constant 0 : i32
    return %arg0, %c0_i32 : i32, i32
  }
}

</mosaic_0001>

<llo_original>
// kernel: tpu_custom_call.1
$region0: #{tpu_custom_call.1}
  #allocation0 [shape = 'u32[]', space=smem, size = 0x4, offset = 0x4, fixed_abs, tag = 'smem constant byte address 0x4 - core index']
  #allocation1 [shape = 'u32[144,128]{1,0:T(1,128)}', space=vmem, size = 0x12000, scoped, tag = 'internal scratch']
  #allocation2 [shape = 'f32[1,1]{1,0:T(1,128)S(6)}', space=smem, size = 0x200, scoped, tag = 'scoped memory for tpu_custom_call.1']
  %s0 = inlined_call_operand.vmem [shape: f32[8,32], index: 0, kind: input, shape index: {}]
  %s1 = inlined_call_operand.vmem [shape: f32[32,1], index: 1, kind: input, shape index: {}]
  %s2 = inlined_call_operand.<no memory space> [shape: f32[1,1], index: 2, kind: input, shape index: {}]
  %s3 = inlined_call_operand.vmem [shape: f32[8,1], index: 3, kind: output, shape index: {}]
  %s4 = sld [smem:[#allocation0]]
  $region22: #{tpu_custom_call.1} parent=0
    _
  %s6 = ssub.s32 1, %s4
  %s7 = scalar_select 0, %s6, %s4
  %8 = sst [smem:[#allocation2]] %s2
  // Predicated region
  $region2: #{tpu_custom_call.1} parent=0 // pred_check
    _
  $region3: #{tpu_custom_call.1} parent=0 // pred_check_branch
    %10 = sbr.rel (0) target = $region5
  $region4: #{tpu_custom_call.1} parent=0 // pred_region
    _
  $region5: #{tpu_custom_call.1} parent=0 // pred_fallthru
    _
  // Predicated region
  $region6: #{tpu_custom_call.1} parent=0 // pred_check
    _
  $region7: #{tpu_custom_call.1} parent=0 // pred_check_branch
    %12 = sbr.rel (0) target = $region9
  $region8: #{tpu_custom_call.1} parent=0 // pred_region
    _
  $region9: #{tpu_custom_call.1} parent=0 // pred_fallthru
    _
  // Predicated region
  $region10: #{tpu_custom_call.1} parent=0 // pred_check
    _
  $region11: #{tpu_custom_call.1} parent=0 // pred_check_branch
    %14 = sbr.rel (0) target = $region13
  $region12: #{tpu_custom_call.1} parent=0 // pred_region
    _
  $region13: #{tpu_custom_call.1} parent=0 // pred_fallthru
    _
  %v15 = vld [vmem:[%s0] sm:$0xff]
  %v16 = vld [vmem:[%s1] sm:$0xff]
  %v17 = vld [vmem:[%s1 + $0x8] sm:$0xff]
  %v18 = vld [vmem:[%s1 + $0x10] sm:$0xff]
  %v19 = vld [vmem:[%s1 + $0x18] sm:$0xff]
  %s20 = sld [smem:[#allocation2]]
  %v21 = vstv %s20
  %vm22 = vcmask 261120
  %v24 = vsel %vm22, %v15, 0
  %26 = vmatprep.subr.mxu0 0.0
  %27 = vmatpush1.msra.mxu0 %v16
  %28 = vmatprep.subr.mxu0 0.0
  %29 = vmatpush1.msra.mxu0 %v17
  %30 = vmatprep.subr.mxu0 0.0
  %31 = vmatpush1.msra.mxu0 %v18
  %32 = vmatprep.subr.mxu0 0.0
  %33 = vmatpush1.msra.mxu0 %v19
  %34 = vmatprep.subr.mxu0 0.0
  %35 = vmatpush1.msra.mxu0 0.0
  %36 = vmatprep.subr.mxu0 0.0
  %37 = vmatpush1.msra.mxu0 0.0
  %38 = vmatprep.subr.mxu0 0.0
  %39 = vmatpush1.msra.mxu0 0.0
  %40 = vmatprep.subr.mxu0 0.0
  %41 = vmatpush1.msra.mxu0 0.0
  %42 = vmatprep.subr.mxu0 0.0
  %43 = vmatpush1.msra.mxu0 0.0
  %44 = vmatprep.subr.mxu0 0.0
  %45 = vmatpush1.msra.mxu0 0.0
  %46 = vmatprep.subr.mxu0 0.0
  %47 = vmatpush1.msra.mxu0 0.0
  %48 = vmatprep.subr.mxu0 0.0
  %49 = vmatpush1.msra.mxu0 0.0
  %50 = vmatprep.subr.mxu0 0.0
  %51 = vmatpush1.msra.mxu0 0.0
  %52 = vmatprep.subr.mxu0 0.0
  %53 = vmatpush1.msra.mxu0 0.0
  %54 = vmatprep.subr.mxu0 0.0
  %55 = vmatpush1.msra.mxu0 0.0
  %56 = vmatprep.subr.mxu0 0.0
  %57 = vmatpush1.msra.mxu0 0.0
  %58 = vmatprep.subr.mxu0 0.0
  %59 = vmatpush1.msra.mxu0 0.0
  %60 = vmatprep.subr.mxu0 0.0
  %61 = vmatpush1.msra.mxu0 0.0
  %62 = vmatprep.subr.mxu0 0.0
  %63 = vmatpush1.msra.mxu0 0.0
  %64 = vmatprep.subr.mxu0 0.0
  %65 = vmatpush1.msra.mxu0 0.0
  %66 = vmatprep.subr.mxu0 0.0
  %67 = vmatpush1.msra.mxu0 0.0
  %68 = vmatprep.subr.mxu0 0.0
  %69 = vmatpush1.msra.mxu0 0.0
  %70 = vmatprep.subr.mxu0 0.0
  %71 = vmatpush1.msra.mxu0 0.0
  %72 = vmatprep.subr.mxu0 0.0
  %73 = vmatpush1.msra.mxu0 0.0
  %74 = vmatprep.subr.mxu0 0.0
  %75 = vmatpush1.msra.mxu0 0.0
  %76 = vmatprep.subr.mxu0 0.0
  %77 = vmatpush1.msra.mxu0 0.0
  %78 = vmatprep.subr.mxu0 0.0
  %79 = vmatpush1.msra.mxu0 0.0
  %80 = vmatprep.subr.mxu0 0.0
  %81 = vmatpush1.msra.mxu0 0.0
  %82 = vmatprep.subr.mxu0 0.0
  %83 = vmatpush1.msra.mxu0 0.0
  %84 = vmatprep.subr.mxu0 0.0
  %85 = vmatpush1.msra.mxu0 0.0
  %86 = vmatprep.subr.mxu0 0.0
  %87 = vmatpush1.msra.mxu0 0.0
  %88 = vmatprep.subr.mxu0 0.0
  %89 = vmatpush1.msra.mxu0 0.0
  %90 = vmatprep.mubr.f32.mxu0 0.0
  %91 = vmatmul.mubr.f32.gmra.mrb[0].mxu0 %v24
  %v92 = vpop.f32.mrb[0].mxu0
  %v93 = vadd.f32 %v21, %v92
  %v94 = vpop.f32.mrb[0].mxu0
  %95 = vdwg.mxu0
  %v96 = vxor.u32 %v93, 2147483648
  %v97 = vmul.f32 %v96, 1.442695
  %v98 = vpow.pop %v97
  %v99 = vadd.f32 %v98, 1.0
  %v100 = vrcp.pop %v99
  %v101 = vmul.f32 1.0, %v100
  %vm102 = vcmask 7168
  %103 = vst.msk [vmem:[%s3] sm:$0xff] %vm102, %v101
  // Predicated region
  $region14: #{tpu_custom_call.1} parent=0 // pred_check
    _
  $region15: #{tpu_custom_call.1} parent=0 // pred_check_branch
    %105 = sbr.rel (0) target = $region17
  $region16: #{tpu_custom_call.1} parent=0 // pred_region
    _
  $region17: #{tpu_custom_call.1} parent=0 // pred_fallthru
    _
  // Predicated region
  $region18: #{tpu_custom_call.1} parent=0 // pred_check
    _
  $region19: #{tpu_custom_call.1} parent=0 // pred_check_branch
    %107 = sbr.rel (0) target = $region21
  $region20: #{tpu_custom_call.1} parent=0 // pred_region
    _
  $region21: #{tpu_custom_call.1} parent=0 // pred_fallthru
    _

</llo_original>
